<compile_context>
chip_gen: v5e
topology: v5e:2x2
jax: 0.10.0
libtpu: 0.0.40
codegen_flags: <defaults>
</compile_context>

<pallas_src>
import functools

import jax
import jax.numpy as jnp
from jax import lax
from jax.experimental import pallas as pl
from jax.experimental.pallas import tpu as pltpu


def _round_up(x, m):
    return ((x + m - 1) // m) * m


def _head_transform_kernel(x_ref, w_ref, b_ref, gamma_ref, beta_ref, o_ref, *, eps):
    # x_ref:     (TM, H)  input rows (native dtype)
    # w_ref:     (H,  H)  dense weight in PyTorch [out, in] layout (VMEM-resident)
    # b_ref:     (1,  H)  dense bias
    # gamma_ref: (1,  H)  LayerNorm weight
    # beta_ref:  (1,  H)  LayerNorm bias

    # Dense: y[m, o] = sum_i x[m, i] * W[o, i]  (contract dim 1 of both == x @ W.T).
    # Native-dtype operands straight to the MXU, f32 accumulation.
    h = lax.dot_general(
        x_ref[...],
        w_ref[...],
        dimension_numbers=(((1,), (1,)), ((), ())),
        preferred_element_type=jnp.float32,
    )

    # Hoisted parameter casts (once per body).
    b = b_ref[...].astype(jnp.float32)
    gamma = gamma_ref[...].astype(jnp.float32)
    beta = beta_ref[...].astype(jnp.float32)

    h = h + b

    # Exact erf-based GELU (PyTorch / HF "gelu").
    h = 0.5 * h * (1.0 + lax.erf(h * 0.7071067811865476))

    # LayerNorm over hidden axis — single-pass sum / sum-of-squares variance.
    inv_h = 1.0 / h.shape[-1]
    s1 = jnp.sum(h, axis=-1, keepdims=True)
    s2 = jnp.sum(h * h, axis=-1, keepdims=True)
    mean = s1 * inv_h
    var = jnp.maximum(s2 * inv_h - mean * mean, 0.0)
    inv = lax.rsqrt(var + eps)

    o_ref[...] = ((h - mean) * inv * gamma + beta).astype(o_ref.dtype)


def bert_prediction_head_transform(hidden_states, dense_w, dense_b, ln_w, ln_b,
                                   *, eps=1e-12, max_block_rows=512,
                                   vmem_budget_bytes=24 << 20):
    """hidden_states: [batch, seq, hidden].
    dense_w: [hidden, hidden] in PyTorch convention (y = x @ dense_w.T + dense_b)."""
    B, S, H = hidden_states.shape
    M = B * S
    x2d = hidden_states.reshape(M, H)

    in_bytes = jnp.dtype(hidden_states.dtype).itemsize
    w_itemsize = jnp.dtype(dense_w.dtype).itemsize
    # Sublane packing of the row axis: f32 -> 8, bf16 -> 16, 8-bit -> 32.
    row_align = {4: 8, 2: 16, 1: 32}.get(in_bytes, 8)

    # VMEM-aware row tile: x + out double buffers, weight (2 bufs, resident),
    # plus ~4 f32 temporaries of the tile inside the body.
    w_bytes = 2 * H * H * w_itemsize
    per_row_bytes = 2 * H * in_bytes + 2 * H * in_bytes + 4 * H * 4
    budget_rows = max((vmem_budget_bytes - w_bytes) // per_row_bytes, row_align)
    budget_rows = (budget_rows // row_align) * row_align

    TM = min(max_block_rows, _round_up(M, row_align), budget_rows)
    TM = max(TM, row_align)

    grid = (pl.cdiv(M, TM),)   # partial last tile handled by Pallas (masked writeback)
    kernel = functools.partial(_head_transform_kernel, eps=eps)

    out2d = pl.pallas_call(
        kernel,
        out_shape=jax.ShapeDtypeStruct((M, H), hidden_states.dtype),
        grid_spec=pltpu.PrefetchScalarGridSpec(
            num_scalar_prefetch=0,
            grid=grid,
            in_specs=[
                pl.BlockSpec((TM, H), lambda i: (i, 0)),   # x row tile
                pl.BlockSpec((H, H), lambda i: (0, 0)),    # W [out, in], VMEM-resident
                pl.BlockSpec((1, H), lambda i: (0, 0)),    # dense bias
                pl.BlockSpec((1, H), lambda i: (0, 0)),    # LN gamma
                pl.BlockSpec((1, H), lambda i: (0, 0)),    # LN beta
            ],
            out_specs=pl.BlockSpec((TM, H), lambda i: (i, 0)),
        ),
        compiler_params=pltpu.CompilerParams(
            dimension_semantics=("parallel",),
            vmem_limit_bytes=64 << 20,
        ),
    )(x2d, dense_w, dense_b.reshape(1, H), ln_w.reshape(1, H), ln_b.reshape(1, H))

    return out2d.reshape(B, S, H)


def _reference(hidden_states, dense_w, dense_b, ln_w, ln_b, eps=1e-12):
    h = jnp.einsum("bsh,oh->bso", hidden_states, dense_w) + dense_b
    h = 0.5 * h * (1.0 + lax.erf(h / jnp.sqrt(2.0)))
    mean = jnp.mean(h, axis=-1, keepdims=True)
    var = jnp.mean((h - mean) ** 2, axis=-1, keepdims=True)
    return (h - mean) / jnp.sqrt(var + eps) * ln_w + ln_b


if __name__ == "__main__":
    batch, seq, hidden = 2, 8, 32
    eps = 1e-12

    key = jax.random.PRNGKey(0)
    k_x, k_w, k_b, k_g, k_beta = jax.random.split(key, 5)

    hidden_states = jax.random.normal(k_x, (batch, seq, hidden), dtype=jnp.float32)
    dense_w = jax.random.normal(k_w, (hidden, hidden), dtype=jnp.float32) * 0.02
    dense_b = jax.random.normal(k_b, (hidden,), dtype=jnp.float32) * 0.02
    ln_w = 1.0 + 0.1 * jax.random.normal(k_g, (hidden,), dtype=jnp.float32)
    ln_b = 0.1 * jax.random.normal(k_beta, (hidden,), dtype=jnp.float32)

    out = bert_prediction_head_transform(hidden_states, dense_w, dense_b, ln_w, ln_b,
                                         eps=eps)
    out = jax.block_until_ready(out)

    ref = _reference(hidden_states, dense_w, dense_b, ln_w, ln_b, eps=eps)
    assert out.shape == (batch, seq, hidden)
    assert jnp.allclose(out, ref, atol=1e-4, rtol=1e-4), "mismatch vs reference"

    print("KERNEL_OK")
</pallas_src>

<mosaic_0001>
module attributes {stable_mosaic.version = 11 : i64} {
  func.func @_head_transform_kernel(%arg0: i32, %arg1: memref<16x32xf32, #tpu.memory_space<vmem>>, %arg2: memref<32x32xf32, #tpu.memory_space<vmem>>, %arg3: memref<1x32xf32, #tpu.memory_space<vmem>>, %arg4: memref<1x32xf32, #tpu.memory_space<vmem>>, %arg5: memref<1x32xf32, #tpu.memory_space<vmem>>, %arg6: memref<16x32xf32, #tpu.memory_space<vmem>>) attributes {dimension_semantics = [#tpu.dimension_semantics<parallel>], iteration_bounds = array<i64: 1>, scalar_prefetch = 0 : i64, scratch_operands = 0 : i64, tpu.core_type = #tpu.core_type<tc>, window_params = [{transform_indices = @transform_0, window_bounds = array<i64: 16, 32>}, {pipeline_mode = #tpu.pipeline_mode<synchronous>, transform_indices = @transform_1, window_bounds = array<i64: 32, 32>}, {pipeline_mode = #tpu.pipeline_mode<synchronous>, transform_indices = @transform_2, window_bounds = array<i64: 1, 32>}, {pipeline_mode = #tpu.pipeline_mode<synchronous>, transform_indices = @transform_3, window_bounds = array<i64: 1, 32>}, {pipeline_mode = #tpu.pipeline_mode<synchronous>, transform_indices = @transform_4, window_bounds = array<i64: 1, 32>}, {transform_indices = @transform_5, window_bounds = array<i64: 16, 32>}]} {
    %c0 = arith.constant 0 : index
    %c0_0 = arith.constant 0 : index
    %0 = vector.load %arg1[%c0, %c0_0] : memref<16x32xf32, #tpu.memory_space<vmem>>, vector<16x32xf32>
    %c0_1 = arith.constant 0 : index
    %c0_2 = arith.constant 0 : index
    %1 = vector.load %arg2[%c0_1, %c0_2] : memref<32x32xf32, #tpu.memory_space<vmem>>, vector<32x32xf32>
    %cst = arith.constant dense<0.000000e+00> : vector<16x32xf32>
    %2 = tpu.matmul %0, %1, %cst {dimension_numbers = #tpu.dot_dimension_numbers<[1], [1], [0], [0], [0, 0, 1, 0], [], []>} : vector<16x32xf32>, vector<32x32xf32>, vector<16x32xf32> -> vector<16x32xf32>
    %c0_3 = arith.constant 0 : index
    %c0_4 = arith.constant 0 : index
    %3 = vector.load %arg3[%c0_3, %c0_4] : memref<1x32xf32, #tpu.memory_space<vmem>>, vector<1x32xf32>
    %c0_5 = arith.constant 0 : index
    %c0_6 = arith.constant 0 : index
    %4 = vector.load %arg4[%c0_5, %c0_6] : memref<1x32xf32, #tpu.memory_space<vmem>>, vector<1x32xf32>
    %c0_7 = arith.constant 0 : index
    %c0_8 = arith.constant 0 : index
    %5 = vector.load %arg5[%c0_7, %c0_8] : memref<1x32xf32, #tpu.memory_space<vmem>>, vector<1x32xf32>
    %6 = vector.broadcast %3 : vector<1x32xf32> to vector<16x32xf32>
    %7 = arith.addf %2, %6 : vector<16x32xf32>
    %cst_9 = arith.constant 5.000000e-01 : f32
    %8 = vector.broadcast %cst_9 : f32 to vector<16x32xf32>
    %9 = arith.mulf %8, %7 : vector<16x32xf32>
    %cst_10 = arith.constant 0.707106769 : f32
    %10 = vector.broadcast %cst_10 : f32 to vector<16x32xf32>
    %11 = arith.mulf %7, %10 : vector<16x32xf32>
    %12 = math.erf %11 : vector<16x32xf32>
    %cst_11 = arith.constant 1.000000e+00 : f32
    %13 = vector.broadcast %cst_11 : f32 to vector<16x32xf32>
    %14 = arith.addf %13, %12 : vector<16x32xf32>
    %15 = arith.mulf %9, %14 : vector<16x32xf32>
    %cst_12 = arith.constant dense<0.000000e+00> : vector<16xf32>
    %16 = vector.multi_reduction <add>, %15, %cst_12 [1] : vector<16x32xf32> to vector<16xf32>
    %17 = vector.shape_cast %16 : vector<16xf32> to vector<16x1xf32>
    %18 = arith.mulf %15, %15 : vector<16x32xf32>
    %cst_13 = arith.constant dense<0.000000e+00> : vector<16xf32>
    %19 = vector.multi_reduction <add>, %18, %cst_13 [1] : vector<16x32xf32> to vector<16xf32>
    %20 = vector.shape_cast %19 : vector<16xf32> to vector<16x1xf32>
    %cst_14 = arith.constant 3.125000e-02 : f32
    %21 = vector.broadcast %cst_14 : f32 to vector<16x1xf32>
    %22 = arith.mulf %17, %21 : vector<16x1xf32>
    %cst_15 = arith.constant 3.125000e-02 : f32
    %23 = vector.broadcast %cst_15 : f32 to vector<16x1xf32>
    %24 = arith.mulf %20, %23 : vector<16x1xf32>
    %25 = arith.mulf %22, %22 : vector<16x1xf32>
    %26 = arith.subf %24, %25 : vector<16x1xf32>
    %cst_16 = arith.constant 0.000000e+00 : f32
    %27 = vector.broadcast %cst_16 : f32 to vector<16x1xf32>
    %28 = arith.maximumf %26, %27 : vector<16x1xf32>
    %cst_17 = arith.constant 9.99999996E-13 : f32
    %29 = vector.broadcast %cst_17 : f32 to vector<16x1xf32>
    %30 = arith.addf %28, %29 : vector<16x1xf32>
    %31 = math.rsqrt %30 : vector<16x1xf32>
    %32 = vector.broadcast %22 : vector<16x1xf32> to vector<16x32xf32>
    %33 = arith.subf %15, %32 : vector<16x32xf32>
    %34 = vector.broadcast %31 : vector<16x1xf32> to vector<16x32xf32>
    %35 = arith.mulf %33, %34 : vector<16x32xf32>
    %36 = vector.broadcast %4 : vector<1x32xf32> to vector<16x32xf32>
    %37 = arith.mulf %35, %36 : vector<16x32xf32>
    %38 = vector.broadcast %5 : vector<1x32xf32> to vector<16x32xf32>
    %39 = arith.addf %37, %38 : vector<16x32xf32>
    %c0_18 = arith.constant 0 : index
    %c0_19 = arith.constant 0 : index
    %40 = vector.load %arg6[%c0_18, %c0_19] : memref<16x32xf32, #tpu.memory_space<vmem>>, vector<16x32xf32>
    tpu.vector_store %arg6[%c0_18, %c0_19], %39 {strides = array<i32>} : memref<16x32xf32, #tpu.memory_space<vmem>>, vector<16x32xf32>,
    return
  }
  func.func @transform_0(%arg0: i32) -> (i32, i32) {
    %c0_i32 = arith.constant 0 : i32
    %c0_i32_0 = arith.constant 0 : i32
    return %arg0, %c0_i32 : i32, i32
  }
  func.func @transform_1(%arg0: i32) -> (i32, i32) {
    %c0_i32 = arith.constant 0 : i32
    %c0_i32_0 = arith.constant 0 : i32
    %c0_i32_1 = arith.constant 0 : i32
    return %c0_i32, %c0_i32_0 : i32, i32
  }
  func.func @transform_2(%arg0: i32) -> (i32, i32) {
    %c0_i32 = arith.constant 0 : i32
    %c0_i32_0 = arith.constant 0 : i32
    %c0_i32_1 = arith.constant 0 : i32
    return %c0_i32, %c0_i32_0 : i32, i32
  }
  func.func @transform_3(%arg0: i32) -> (i32, i32) {
    %c0_i32 = arith.constant 0 : i32
    %c0_i32_0 = arith.constant 0 : i32
    %c0_i32_1 = arith.constant 0 : i32
    return %c0_i32, %c0_i32_0 : i32, i32
  }
  func.func @transform_4(%arg0: i32) -> (i32, i32) {
    %c0_i32 = arith.constant 0 : i32
    %c0_i32_0 = arith.constant 0 : i32
    %c0_i32_1 = arith.constant 0 : i32
    return %c0_i32, %c0_i32_0 : i32, i32
  }
  func.func @transform_5(%arg0: i32) -> (i32, i32) {
    %c0_i32 = arith.constant 0 : i32
    %c0_i32_0 = arith.constant 0 : i32
    return %arg0, %c0_i32 : i32, i32
  }
}

</mosaic_0001>

<llo_original>
// kernel: tpu_custom_call.1
$region0: #{tpu_custom_call.1}
  #allocation0 [shape = 'u32[]', space=smem, size = 0x4, offset = 0x4, fixed_abs, tag = 'smem constant byte address 0x4 - core index']
  #allocation1 [shape = 'u32[72,128]{1,0:T(1,128)}', space=vmem, size = 0x9000, scoped, tag = 'internal scratch']
  %s0 = inlined_call_operand.hbm [shape: f32[16,32], index: 0, kind: input, shape index: {}]
  %s1 = inlined_call_operand.hbm [shape: f32[32,32], index: 1, kind: input, shape index: {}]
  %s2 = inlined_call_operand.vmem [shape: f32[1,32], index: 2, kind: input, shape index: {}]
  %s3 = inlined_call_operand.vmem [shape: f32[1,32], index: 3, kind: input, shape index: {}]
  %s4 = inlined_call_operand.vmem [shape: f32[1,32], index: 4, kind: input, shape index: {}]
  %s5 = inlined_call_operand.hbm [shape: f32[16,32], index: 5, kind: output, shape index: {}]
  %s6 = sld [smem:[#allocation0]]
  $region38: #{tpu_custom_call.1} parent=0
    _
  %s8 = ssub.s32 1, %s6
  %s9 = scalar_select 0, %s8, %s6
  $region1: #{tpu_custom_call.1} parent=0
    #allocation2 [shape = 'u8[8192]{0}', space=vmem, size = 0x2000, scoped, tag = 'input window, operand 0, single buffered']
    #allocation3 [shape = 's32[1]{0}', space=sflag, size = 0x4, scoped, tag = 'scoped memory for tpu_custom_call.1']
    #allocation4 [shape = 's32[1]{0}', space=sflag, size = 0x4, scoped, tag = 'scoped memory for tpu_custom_call.1']
    #allocation5 [shape = 'u8[16384]{0}', space=vmem, size = 0x4000, scoped, tag = 'input window, operand 1, single buffered']
    #allocation6 [shape = 's32[1]{0}', space=sflag, size = 0x4, scoped, tag = 'scoped memory for tpu_custom_call.1']
    #allocation7 [shape = 'u8[8192]{0}', space=vmem, size = 0x2000, scoped, tag = 'output window, operand 0, single buffered']
    %10 = vsyncpa [#allocation3], 0
    %11 = vsyncpa [#allocation6], 0
    %12 = vsyncpa [#allocation4], 0
    // Predicated region
    $region2: #{tpu_custom_call.1} parent=1 // pred_check
      _
    $region3: #{tpu_custom_call.1} parent=1 // pred_check_branch
      %14 = sbr.rel (0) target = $region5
    $region4: #{tpu_custom_call.1} parent=1 // pred_region
      %16 = vsyncadd [#allocation3], 0
      %s17 = sshll.u32 %s0, 4
      %s18 = int_to_ptr.hbm [resolvable:$true] %s17
      %s19 = sshll.u32 [#allocation2], 4
      %s20 = int_to_ptr.vmem [resolvable:$true] %s19
      %25 = dma.hbm_to_vmem [thread:$0]  %s18, 256, %s20, [#allocation3], 128, 128, 8
    $region5: #{tpu_custom_call.1} parent=1 // pred_fallthru
      _
    // Predicated region
    $region6: #{tpu_custom_call.1} parent=1 // pred_check
      _
    $region7: #{tpu_custom_call.1} parent=1 // pred_check_branch
      %27 = sbr.rel (0) target = $region9
    $region8: #{tpu_custom_call.1} parent=1 // pred_region
      %29 = vsyncadd [#allocation6], 0
      %s30 = sshll.u32 %s1, 4
      %s31 = int_to_ptr.hbm [resolvable:$true] %s30
      %s32 = sshll.u32 [#allocation5], 4
      %s33 = int_to_ptr.vmem [resolvable:$true] %s32
      %38 = dma.hbm_to_vmem [thread:$0]  %s31, 512, %s33, [#allocation6], 128, 128, 8
    $region9: #{tpu_custom_call.1} parent=1 // pred_fallthru
      _
    // Predicated region
    $region10: #{tpu_custom_call.1} parent=1 // pred_check
      _
    $region11: #{tpu_custom_call.1} parent=1 // pred_check_branch
      %40 = sbr.rel (0) target = $region13
    $region12: #{tpu_custom_call.1} parent=1 // pred_region
      _
    $region13: #{tpu_custom_call.1} parent=1 // pred_fallthru
      _
    // Predicated region
    $region14: #{tpu_custom_call.1} parent=1 // pred_check
      _
    $region15: #{tpu_custom_call.1} parent=1 // pred_check_branch
      %42 = sbr.rel (0) target = $region17
    $region16: #{tpu_custom_call.1} parent=1 // pred_region
      _
    $region17: #{tpu_custom_call.1} parent=1 // pred_fallthru
      _
    // Predicated region
    $region18: #{tpu_custom_call.1} parent=1 // pred_check
      _
    $region19: #{tpu_custom_call.1} parent=1 // pred_check_branch
      %44 = sbr.rel (0) target = $region21
    $region20: #{tpu_custom_call.1} parent=1 // pred_region
      _
    $region21: #{tpu_custom_call.1} parent=1 // pred_fallthru
      _
    // Predicated region
    $region22: #{tpu_custom_call.1} parent=1 // pred_check
      _
    $region23: #{tpu_custom_call.1} parent=1 // pred_check_branch
      %46 = sbr.rel (0) target = $region25
    $region24: #{tpu_custom_call.1} parent=1 // pred_region
      %48 = dma.done [#allocation3], 256
    $region25: #{tpu_custom_call.1} parent=1 // pred_fallthru
      _
    // Predicated region
    $region26: #{tpu_custom_call.1} parent=1 // pred_check
      _
    $region27: #{tpu_custom_call.1} parent=1 // pred_check_branch
      %50 = sbr.rel (0) target = $region29
    $region28: #{tpu_custom_call.1} parent=1 // pred_region
      %52 = dma.done [#allocation6], 512
    $region29: #{tpu_custom_call.1} parent=1 // pred_fallthru
      _
    %v53 = vld [vmem:[#allocation2] sm:$0xff]
    %v54 = vld [vmem:[#allocation2 + $0x8] sm:$0xff]
    %v55 = vld [vmem:[#allocation5] sm:$0xff]
    %v56 = vld [vmem:[#allocation5 + $0x8] sm:$0xff]
    %v57 = vld [vmem:[#allocation5 + $0x10] sm:$0xff]
    %v58 = vld [vmem:[#allocation5 + $0x18] sm:$0xff]
    %v59 = vld [vmem:[%s2] sm:$0x1]
    %v60 = vld [vmem:[%s3] sm:$0x1]
    %v61 = vld [vmem:[%s4] sm:$0x1]
    %v63 = vperm.slane %v59, 0
    %vm65 = vcmask 261120
    %v67 = vsel %vm65, %v53, 0
    %v70 = vsel %vm65, %v54, 0
    %v73 = vsel %vm65, %v55, 0
    %v76 = vsel %vm65, %v56, 0
    %v79 = vsel %vm65, %v57, 0
    %v82 = vsel %vm65, %v58, 0
    %84 = vmatpush.xpose.msra.mxu0 0.0
    %85 = vmatpush.xpose.msra.mxu0 0.0
    %86 = vmatpush.xpose.msra.mxu0 0.0
    %87 = vmatpush.xpose.msra.mxu0 0.0
    %88 = vmatpush.xpose.msra.mxu0 0.0
    %89 = vmatpush.xpose.msra.mxu0 0.0
    %90 = vmatpush.xpose.msra.mxu0 0.0
    %91 = vmatpush.xpose.msra.mxu0 0.0
    %92 = vmatpush.xpose.msra.mxu0 0.0
    %93 = vmatpush.xpose.msra.mxu0 0.0
    %94 = vmatpush.xpose.msra.mxu0 0.0
    %95 = vmatpush.xpose.msra.mxu0 0.0
    %96 = vmatpush.xpose.msra.mxu0 %v82
    %97 = vmatpush.xpose.msra.mxu0 %v79
    %98 = vmatpush.xpose.msra.mxu0 %v76
    %99 = vmatpush.xpose.msra.mxu0 %v73
    %100 = vmatmul.f32.gmra.mxu0 %v67
    %v101 = vpop.f32.mrf.mxu0
    %v102 = vadd.f32 %v63, %v101
    %103 = vmatmul.f32.gmra.mxu0 %v70
    %v104 = vpop.f32.mrf.mxu0
    %v105 = vadd.f32 %v63, %v104
    %106 = vdwg.mxu0
    %v107 = vmul.f32 %v102, 0.5
    %v108 = vmul.f32 %v105, 0.5
    %v109 = vmul.f32 %v102, 0.70710677
    %v110 = vmul.f32 %v105, 0.70710677
    %v111 = vmul.f32 %v109, %v109
    %v112 = vmin.f32 16.0, %v111
    %v113 = vmul.f32 %v112, 2.1237322e-06
    %v114 = vadd.f32 %v113, 0.00028619796
    %v115 = vmul.f32 %v112, %v114
    %v116 = vadd.f32 %v115, 0.0036580483
    %v117 = vmul.f32 %v112, %v116
    %v118 = vadd.f32 %v117, 0.05243302
    %v119 = vmul.f32 %v112, %v118
    %v120 = vadd.f32 %v119, 0.18741608
    %v121 = vmul.f32 %v112, %v120
    %v122 = vadd.f32 %v121, 1.1283791
    %v123 = vmul.f32 %v109, %v122
    %v124 = vmul.f32 %v112, 3.8918573e-05
    %v125 = vadd.f32 %v124, 0.001143296
    %v126 = vmul.f32 %v112, %v125
    %v127 = vadd.f32 %v126, 0.014752088
    %v128 = vmul.f32 %v112, %v127
    %v129 = vadd.f32 %v128, 0.112945676
    %v130 = vmul.f32 %v112, %v129
    %v131 = vadd.f32 %v130, 0.4994258
    %v132 = vmul.f32 %v112, %v131
    %v133 = vadd.f32 %v132, 1.0
    %v134 = vrcp.pop %v133
    %v135 = vmul.f32 %v133, %v134
    %v136 = vsub.f32 1.0, %v135
    %v137 = vmul.f32 %v134, %v136
    %v138 = vadd.f32 %v134, %v137
    %vm139 = vweird.f32 %v133
    %vm140 = vweird.f32 %v134
    %vm141 = vmor %vm139, %vm140
    %v142 = vsel %vm141, %v134, %v138
    %v143 = vand.u32 2147483647, %v133
    %vm144 = vcmp.eq.f32.partialorder %v143, 8.507059e+37
    %v145 = vand.u32 %v133, 2147483648
    %v146 = vor.u32 1.1754944e-38, %v145
    %v147 = vsel %vm144, %v146, %v142
    %v148 = vmul.f32 %v123, %v147
    %v149 = vmin.f32 %v148, 1.0
    %v150 = vmax.f32 %v149, -1.0
    %v151 = vmul.f32 %v110, %v110
    %v152 = vmin.f32 16.0, %v151
    %v153 = vmul.f32 %v152, 2.1237322e-06
    %v154 = vadd.f32 %v153, 0.00028619796
    %v155 = vmul.f32 %v152, %v154
    %v156 = vadd.f32 %v155, 0.0036580483
    %v157 = vmul.f32 %v152, %v156
    %v158 = vadd.f32 %v157, 0.05243302
    %v159 = vmul.f32 %v152, %v158
    %v160 = vadd.f32 %v159, 0.18741608
    %v161 = vmul.f32 %v152, %v160
    %v162 = vadd.f32 %v161, 1.1283791
    %v163 = vmul.f32 %v110, %v162
    %v164 = vmul.f32 %v152, 3.8918573e-05
    %v165 = vadd.f32 %v164, 0.001143296
    %v166 = vmul.f32 %v152, %v165
    %v167 = vadd.f32 %v166, 0.014752088
    %v168 = vmul.f32 %v152, %v167
    %v169 = vadd.f32 %v168, 0.112945676
    %v170 = vmul.f32 %v152, %v169
    %v171 = vadd.f32 %v170, 0.4994258
    %v172 = vmul.f32 %v152, %v171
    %v173 = vadd.f32 %v172, 1.0
    %v174 = vrcp.pop %v173
    %v175 = vmul.f32 %v173, %v174
    %v176 = vsub.f32 1.0, %v175
    %v177 = vmul.f32 %v174, %v176
    %v178 = vadd.f32 %v174, %v177
    %vm179 = vweird.f32 %v173
    %vm180 = vweird.f32 %v174
    %vm181 = vmor %vm179, %vm180
    %v182 = vsel %vm181, %v174, %v178
    %v183 = vand.u32 2147483647, %v173
    %vm184 = vcmp.eq.f32.partialorder %v183, 8.507059e+37
    %v185 = vand.u32 %v173, 2147483648
    %v186 = vor.u32 1.1754944e-38, %v185
    %v187 = vsel %vm184, %v186, %v182
    %v188 = vmul.f32 %v163, %v187
    %v189 = vmin.f32 %v188, 1.0
    %v190 = vmax.f32 %v189, -1.0
    %v191 = vadd.f32 %v150, 1.0
    %v192 = vadd.f32 %v190, 1.0
    %v193 = vmul.f32 %v107, %v191
    %v194 = vmul.f32 %v108, %v192
    %v195 = vsel %vm65, %v193, 0.0
    %196 = vadd.xlane.f32.xlu0 %v195
    %v197 = vpop.xlane.xlu0 %196
    %v198 = vsel %vm65, %v194, 0.0
    %199 = vadd.xlane.f32.xlu0 %v198
    %v200 = vpop.xlane.xlu0 %199
    %v201 = vmul.f32 %v193, %v193
    %v202 = vmul.f32 %v194, %v194
    %v203 = vsel %vm65, %v201, 0.0
    %204 = vadd.xlane.f32.xlu0 %v203
    %v205 = vpop.xlane.xlu0 %204
    %v206 = vsel %vm65, %v202, 0.0
    %207 = vadd.xlane.f32.xlu0 %v206
    %v208 = vpop.xlane.xlu0 %207
    %v209 = vmul.f32 %v197, 0.03125
    %v210 = vmul.f32 %v200, 0.03125
    %v211 = vmul.f32 %v205, 0.03125
    %v212 = vmul.f32 %v208, 0.03125
    %v213 = vmul.f32 %v209, %v209
    %v214 = vmul.f32 %v210, %v210
    %v215 = vsub.f32 %v211, %v213
    %v216 = vsub.f32 %v212, %v214
    %v217 = vmax.f32 %v215, 0.0
    %v218 = vmax.f32 %v216, 0.0
    %v219 = vadd.f32 %v217, 1e-12
    %v220 = vadd.f32 %v218, 1e-12
    %v221 = vrsqrt.pop %v219
    %v222 = vmul.f32 %v221, %v219
    %v223 = vmul.f32 %v222, %v221
    %v224 = vmul.f32 0.5, %v223
    %v225 = vsub.f32 1.5, %v224
    %v226 = vmul.f32 %v221, %v225
    %vm227 = vweird.f32 %v219
    %vm228 = vweird.f32 %v221
    %vm229 = vmor %vm227, %vm228
    %v230 = vsel %vm229, %v221, %v226
    %v231 = vrsqrt.pop %v220
    %v232 = vmul.f32 %v231, %v220
    %v233 = vmul.f32 %v232, %v231
    %v234 = vmul.f32 0.5, %v233
    %v235 = vsub.f32 1.5, %v234
    %v236 = vmul.f32 %v231, %v235
    %vm237 = vweird.f32 %v220
    %vm238 = vweird.f32 %v231
    %vm239 = vmor %vm237, %vm238
    %v240 = vsel %vm239, %v231, %v236
    %v241 = vsub.f32 %v193, %v209
    %v242 = vsub.f32 %v194, %v210
    %v243 = vmul.f32 %v241, %v230
    %v244 = vmul.f32 %v242, %v240
    %v246 = vperm.slane %v60, 0
    %v248 = vmul.f32 %v243, %v246
    %v249 = vmul.f32 %v244, %v246
    %v251 = vperm.slane %v61, 0
    %v253 = vadd.f32 %v248, %v251
    %v254 = vadd.f32 %v249, %v251
    %255 = vst.msk [vmem:[#allocation7] sm:$0xff] %vm65, %v253
    %256 = vst.msk [vmem:[#allocation7 + $0x8] sm:$0xff] %vm65, %v254
    // Predicated region
    $region30: #{tpu_custom_call.1} parent=1 // pred_check
      _
    $region31: #{tpu_custom_call.1} parent=1 // pred_check_branch
      %258 = sbr.rel (0) target = $region33
    $region32: #{tpu_custom_call.1} parent=1 // pred_region
      %260 = vsyncadd [#allocation4], 0
      %s261 = sshll.u32 [#allocation7], 4
      %s262 = int_to_ptr.vmem [resolvable:$true] %s261
      %s263 = sshll.u32 %s5, 4
      %s264 = int_to_ptr.hbm [resolvable:$true] %s263
      %269 = dma.vmem_to_hbm [thread:$0]  %s262, 256, %s264, [#allocation4], 128, 128, 8
    $region33: #{tpu_custom_call.1} parent=1 // pred_fallthru
      _
    // Predicated region
    $region34: #{tpu_custom_call.1} parent=1 // pred_check
      _
    $region35: #{tpu_custom_call.1} parent=1 // pred_check_branch
      %271 = sbr.rel (0) target = $region37
    $region36: #{tpu_custom_call.1} parent=1 // pred_region
      %273 = dma.done [#allocation4], 256
    $region37: #{tpu_custom_call.1} parent=1 // pred_fallthru
      _
    %274 = vsyncpa [#allocation3], 1
    %275 = vsyncpa [#allocation6], 1
    %276 = vsyncpa [#allocation4], 1

</llo_original>
